<compile_context>
chip_gen: v7x
topology: tpu7x:2x2x1
jax: 0.10.0
libtpu: 0.0.40
codegen_flags: <defaults>
</compile_context>

<pallas_src>
import functools

import jax
import jax.numpy as jnp
from jax import lax
from jax.experimental import pallas as pl
from jax.experimental.pallas import tpu as pltpu


# ----------------------------------------------------------------------------
# Pallas kernel: fused im2col-in-VMEM conv + bias + ReLU, transposed GEMM layout
# ----------------------------------------------------------------------------
def _conv_relu_kernel(x_ref, w_ref, b_ref, o_ref, *, H, W, K, pad):
    # x_ref: (1, Cin, L)   H-padded image row for this batch, flattened, with `pad`
    #                      extra zeros front/back;  L = (H+2*pad)*W + 2*pad
    # w_ref: (K*K, Cout, Cin)  weights already scaled by 1/255, w_ref[di*K+dj] = W_dd
    # b_ref: (Cout, 1)
    # o_ref: (1, Cout, H*W)    lane-dense output (H*W on lanes)
    HW = H * W
    Cin = x_ref.shape[1]
    Cout = w_ref.shape[1]

    x = x_ref[0]                                                  # (Cin, L)
    # output-column index of every lane position (for edge masking in the W direction)
    col = jax.lax.broadcasted_iota(jnp.int32, (Cin, HW), 1) % W

    acc = jnp.zeros((Cout, HW), dtype=jnp.float32)
    for di in range(K):                                           # statically unrolled
        for dj in range(K):
            off = di * W + dj
            # value at flat position m=(h*W+w) is pixel (h+di-pad, w+dj-pad) of the
            # original image (zero rows come from the H padding); columns that wrapped
            # across a row boundary are zeroed below.
            xs = x[:, off:off + HW]                               # (Cin, HW)
            lo = pad - dj                                         # zero cols  <  lo
            hi = W + pad - dj                                     # zero cols  >= hi
            if lo > 0:
                xs = jnp.where(col < lo, 0.0, xs)
            if hi < W:
                xs = jnp.where(col >= hi, 0.0, xs)
            acc = acc + jnp.dot(w_ref[di * K + dj], xs,           # (Cout,Cin)@(Cin,HW)
                                preferred_element_type=jnp.float32)

    o_ref[0] = jnp.maximum(acc + b_ref[...], 0.0)                 # bias + ReLU


def conv_relu_pallas(x_flat, w9, bias2, *, H, W, K, pad):
    """x_flat: (B, Cin, L) raw [0,255] values; w9: (K*K, Cout, Cin) (already /255);
    bias2: (Cout, 1)  ->  (B, Cout, H*W) float32."""
    B, Cin, L = x_flat.shape
    KK, Cout, _ = w9.shape
    HW = H * W

    kernel = functools.partial(_conv_relu_kernel, H=H, W=W, K=K, pad=pad)
    return pl.pallas_call(
        kernel,
        out_shape=jax.ShapeDtypeStruct((B, Cout, HW), jnp.float32),
        grid=(B,),
        in_specs=[
            pl.BlockSpec((1, Cin, L), lambda b: (b, 0, 0)),       # one image / step
            pl.BlockSpec((KK, Cout, Cin), lambda b: (0, 0, 0)),   # resident weights
            pl.BlockSpec((Cout, 1), lambda b: (0, 0)),            # resident bias
        ],
        out_specs=pl.BlockSpec((1, Cout, HW), lambda b: (b, 0, 0)),
        compiler_params=pltpu.CompilerParams(
            dimension_semantics=("parallel",),                    # batch across TCs (v7x)
        ),
    )(x_flat, w9, bias2)


# ----------------------------------------------------------------------------
# BaseModel.forward semantics (numpy uint8 input path)
# ----------------------------------------------------------------------------
def base_model_forward(image_bhwc_u8, conv_w, conv_b):
    """image_bhwc_u8: (B, H, W, 3) values in [0,255] (uint8-style, channels last)
       conv_w: (Cout, Cin, K, K) PyTorch layout;  conv_b: (Cout,)
       returns (B, Cout, H, W) float32 (NCHW, like the PyTorch model output)."""
    # pre_transform: assertions only -> no-op.  transform: identity.
    img = image_bhwc_u8
    if img.ndim == 3:                                   # post_transform: add batch dim
        img = img[None]
    # post_transform: 'b h w c -> b c h w' (same heuristic as the reference module;
    # for the numpy uint8 path the input is guaranteed channels-last with C==3).
    if img.shape[1] > img.shape[-1]:
        img = jnp.transpose(img, (0, 3, 1, 2))          # NHWC -> NCHW

    B, Cin, H, W = img.shape
    Cout, _, K, _ = conv_w.shape
    pad = K // 2

    # Fold post_transform's 1/255 into the (linear) conv weights; reorder so
    # w9[di*K+dj] is the (Cout, Cin) slice for filter offset (di, dj).
    w9 = jnp.transpose(conv_w, (2, 3, 0, 1)).reshape(K * K, Cout, Cin) * (1.0 / 255.0)
    b2 = conv_b.reshape(Cout, 1)

    # H-only zero pad, flatten spatial, tiny front/back zero pad: the kernel builds
    # all 9 shifted views from this single ~1.1x-sized buffer (no HBM im2col).
    xp = jnp.pad(img.astype(jnp.float32), ((0, 0), (0, 0), (pad, pad), (0, 0)))
    xf = xp.reshape(B, Cin, (H + 2 * pad) * W)
    xf = jnp.pad(xf, ((0, 0), (0, 0), (pad, pad)))      # (B, Cin, (H+2p)*W + 2p)

    out_flat = conv_relu_pallas(xf, w9, b2, H=H, W=W, K=K, pad=pad)   # (B, Cout, H*W)
    out = out_flat.reshape(B, Cout, H, W)               # contiguous reshape, no transpose
    # reshape_func: identity
    return out


# ----------------------------------------------------------------------------
# Main
# ----------------------------------------------------------------------------
if __name__ == "__main__":
    key = jax.random.PRNGKey(0)
    k_img, k_w, k_b = jax.random.split(key, 3)

    B, H, W, Cin, Cout, K = 2, 16, 16, 3, 8, 3

    # uint8-style image (numpy path of BaseModel.pre_transform / post_transform)
    image = jax.random.randint(k_img, (B, H, W, Cin), 0, 256).astype(jnp.float32)

    # deterministic "Conv2d(3, 8, 3, padding=1)" parameters
    conv_w = 0.1 * jax.random.normal(k_w, (Cout, Cin, K, K), dtype=jnp.float32)
    conv_b = 0.1 * jax.random.normal(k_b, (Cout,), dtype=jnp.float32)

    out = base_model_forward(image, conv_w, conv_b)
    out = jax.block_until_ready(out)

    # reference: same /255 + conv + bias + relu with lax.conv
    x_nchw = jnp.transpose(image, (0, 3, 1, 2)) / 255.0
    ref = lax.conv_general_dilated(
        x_nchw, conv_w, window_strides=(1, 1), padding=((1, 1), (1, 1)),
        dimension_numbers=("NCHW", "OIHW", "NCHW"),
        precision=lax.Precision.HIGHEST,
    ) + conv_b.reshape(1, Cout, 1, 1)
    ref = jnp.maximum(ref, 0.0)

    assert out.shape == (B, Cout, H, W), out.shape
    err = float(jnp.max(jnp.abs(out - ref)))
    assert jnp.allclose(out, ref, atol=1e-3, rtol=1e-3), err

    print("KERNEL_OK")
</pallas_src>

<mosaic_0001>
module attributes {stable_mosaic.version = 11 : i64} {
  func.func @_conv_relu_kernel(%arg0: i32, %arg1: memref<1x3x290xf32, #tpu.memory_space<vmem>>, %arg2: memref<9x8x3xf32, #tpu.memory_space<vmem>>, %arg3: memref<8x1xf32, #tpu.memory_space<vmem>>, %arg4: memref<1x8x256xf32, #tpu.memory_space<vmem>>) attributes {dimension_semantics = [#tpu.dimension_semantics<parallel>], iteration_bounds = array<i64: 2>, scalar_prefetch = 0 : i64, scratch_operands = 0 : i64, tpu.core_type = #tpu.core_type<tc>, window_params = [{transform_indices = @transform_0, window_bounds = array<i64: 1, 3, 290>}, {pipeline_mode = #tpu.pipeline_mode<synchronous>, transform_indices = @transform_1, window_bounds = array<i64: 9, 8, 3>}, {pipeline_mode = #tpu.pipeline_mode<synchronous>, transform_indices = @transform_2, window_bounds = array<i64: 8, 1>}, {transform_indices = @transform_3, window_bounds = array<i64: 1, 8, 256>}]} {
    %c0 = arith.constant 0 : index
    %c0_0 = arith.constant 0 : index
    %c0_1 = arith.constant 0 : index
    %0 = vector.load %arg1[%c0, %c0_0, %c0_1] : memref<1x3x290xf32, #tpu.memory_space<vmem>>, vector<1x3x290xf32>
    %1 = vector.shape_cast %0 : vector<1x3x290xf32> to vector<3x290xf32>
    %2 = tpu.iota {dimensions = array<i32: 1>} : vector<3x256xi32>
    %c16_i32 = arith.constant 16 : i32
    %c0_i32 = arith.constant 0 : i32
    %3 = arith.cmpi eq, %c16_i32, %c0_i32 : i32
    %c1_i32 = arith.constant 1 : i32
    %4 = arith.select %3, %c1_i32, %c16_i32 : i32
    %5 = vector.broadcast %4 : i32 to vector<3x256xi32>
    %6 = arith.remsi %2, %5 : vector<3x256xi32>
    %c0_i32_2 = arith.constant 0 : i32
    %7 = vector.broadcast %c0_i32_2 : i32 to vector<3x256xi32>
    %8 = arith.cmpi ne, %6, %7 : vector<3x256xi32>
    %c0_i32_3 = arith.constant 0 : i32
    %9 = vector.broadcast %c0_i32_3 : i32 to vector<3x256xi32>
    %10 = arith.cmpi slt, %6, %9 : vector<3x256xi32>
    %c0_i32_4 = arith.constant 0 : i32
    %11 = arith.cmpi slt, %4, %c0_i32_4 : i32
    %12 = vector.broadcast %11 : i1 to vector<3x256xi1>
    %13 = vector.broadcast %12 : vector<3x256xi1> to vector<3x256xi1>
    %14 = arith.xori %10, %13 : vector<3x256xi1>
    %15 = arith.andi %14, %8 : vector<3x256xi1>
    %16 = vector.broadcast %4 : i32 to vector<3x256xi32>
    %17 = arith.addi %6, %16 : vector<3x256xi32>
    %18 = arith.select %15, %17, %6 : vector<3x256xi1>, vector<3x256xi32>
    %cst = arith.constant 0.000000e+00 : f32
    %19 = vector.broadcast %cst : f32 to vector<8x256xf32>
    %20 = vector.extract_strided_slice %1 {offsets = [0, 0], sizes = [3, 256], strides = [1, 1]} : vector<3x290xf32> to vector<3x256xf32>
    %c1_i32_5 = arith.constant 1 : i32
    %21 = vector.broadcast %c1_i32_5 : i32 to vector<3x256xi32>
    %22 = arith.cmpi slt, %18, %21 : vector<3x256xi32>
    %cst_6 = arith.constant 0.000000e+00 : f32
    %23 = vector.broadcast %cst_6 : f32 to vector<3x256xf32>
    %24 = arith.select %22, %23, %20 : vector<3x256xi1>, vector<3x256xf32>
    %c0_7 = arith.constant 0 : index
    %c0_8 = arith.constant 0 : index
    %c0_9 = arith.constant 0 : index
    %25 = vector.load %arg2[%c0_7, %c0_8, %c0_9] : memref<9x8x3xf32, #tpu.memory_space<vmem>>, vector<1x8x3xf32>
    %26 = vector.shape_cast %25 : vector<1x8x3xf32> to vector<8x3xf32>
    %cst_10 = arith.constant dense<0.000000e+00> : vector<8x256xf32>
    %27 = tpu.matmul %26, %24, %cst_10 {dimension_numbers = #tpu.dot_dimension_numbers<[1], [0], [0], [1], [0, 0, 1, 1], [], []>} : vector<8x3xf32>, vector<3x256xf32>, vector<8x256xf32> -> vector<8x256xf32>
    %28 = arith.addf %19, %27 : vector<8x256xf32>
    %29 = vector.extract_strided_slice %1 {offsets = [0, 1], sizes = [3, 256], strides = [1, 1]} : vector<3x290xf32> to vector<3x256xf32>
    %c1 = arith.constant 1 : index
    %c0_11 = arith.constant 0 : index
    %c0_12 = arith.constant 0 : index
    %30 = vector.load %arg2[%c1, %c0_11, %c0_12] : memref<9x8x3xf32, #tpu.memory_space<vmem>>, vector<1x8x3xf32>
    %31 = vector.shape_cast %30 : vector<1x8x3xf32> to vector<8x3xf32>
    %cst_13 = arith.constant dense<0.000000e+00> : vector<8x256xf32>
    %32 = tpu.matmul %31, %29, %cst_13 {dimension_numbers = #tpu.dot_dimension_numbers<[1], [0], [0], [1], [0, 0, 1, 1], [], []>} : vector<8x3xf32>, vector<3x256xf32>, vector<8x256xf32> -> vector<8x256xf32>
    %33 = arith.addf %28, %32 : vector<8x256xf32>
    %34 = vector.extract_strided_slice %1 {offsets = [0, 2], sizes = [3, 256], strides = [1, 1]} : vector<3x290xf32> to vector<3x256xf32>
    %c15_i32 = arith.constant 15 : i32
    %35 = vector.broadcast %c15_i32 : i32 to vector<3x256xi32>
    %36 = arith.cmpi sge, %18, %35 : vector<3x256xi32>
    %cst_14 = arith.constant 0.000000e+00 : f32
    %37 = vector.broadcast %cst_14 : f32 to vector<3x256xf32>
    %38 = arith.select %36, %37, %34 : vector<3x256xi1>, vector<3x256xf32>
    %c2 = arith.constant 2 : index
    %c0_15 = arith.constant 0 : index
    %c0_16 = arith.constant 0 : index
    %39 = vector.load %arg2[%c2, %c0_15, %c0_16] : memref<9x8x3xf32, #tpu.memory_space<vmem>>, vector<1x8x3xf32>
    %40 = vector.shape_cast %39 : vector<1x8x3xf32> to vector<8x3xf32>
    %cst_17 = arith.constant dense<0.000000e+00> : vector<8x256xf32>
    %41 = tpu.matmul %40, %38, %cst_17 {dimension_numbers = #tpu.dot_dimension_numbers<[1], [0], [0], [1], [0, 0, 1, 1], [], []>} : vector<8x3xf32>, vector<3x256xf32>, vector<8x256xf32> -> vector<8x256xf32>
    %42 = arith.addf %33, %41 : vector<8x256xf32>
    %43 = vector.extract_strided_slice %1 {offsets = [0, 16], sizes = [3, 256], strides = [1, 1]} : vector<3x290xf32> to vector<3x256xf32>
    %c1_i32_18 = arith.constant 1 : i32
    %44 = vector.broadcast %c1_i32_18 : i32 to vector<3x256xi32>
    %45 = arith.cmpi slt, %18, %44 : vector<3x256xi32>
    %cst_19 = arith.constant 0.000000e+00 : f32
    %46 = vector.broadcast %cst_19 : f32 to vector<3x256xf32>
    %47 = arith.select %45, %46, %43 : vector<3x256xi1>, vector<3x256xf32>
    %c3 = arith.constant 3 : index
    %c0_20 = arith.constant 0 : index
    %c0_21 = arith.constant 0 : index
    %48 = vector.load %arg2[%c3, %c0_20, %c0_21] : memref<9x8x3xf32, #tpu.memory_space<vmem>>, vector<1x8x3xf32>
    %49 = vector.shape_cast %48 : vector<1x8x3xf32> to vector<8x3xf32>
    %cst_22 = arith.constant dense<0.000000e+00> : vector<8x256xf32>
    %50 = tpu.matmul %49, %47, %cst_22 {dimension_numbers = #tpu.dot_dimension_numbers<[1], [0], [0], [1], [0, 0, 1, 1], [], []>} : vector<8x3xf32>, vector<3x256xf32>, vector<8x256xf32> -> vector<8x256xf32>
    %51 = arith.addf %42, %50 : vector<8x256xf32>
    %52 = vector.extract_strided_slice %1 {offsets = [0, 17], sizes = [3, 256], strides = [1, 1]} : vector<3x290xf32> to vector<3x256xf32>
    %c4 = arith.constant 4 : index
    %c0_23 = arith.constant 0 : index
    %c0_24 = arith.constant 0 : index
    %53 = vector.load %arg2[%c4, %c0_23, %c0_24] : memref<9x8x3xf32, #tpu.memory_space<vmem>>, vector<1x8x3xf32>
    %54 = vector.shape_cast %53 : vector<1x8x3xf32> to vector<8x3xf32>
    %cst_25 = arith.constant dense<0.000000e+00> : vector<8x256xf32>
    %55 = tpu.matmul %54, %52, %cst_25 {dimension_numbers = #tpu.dot_dimension_numbers<[1], [0], [0], [1], [0, 0, 1, 1], [], []>} : vector<8x3xf32>, vector<3x256xf32>, vector<8x256xf32> -> vector<8x256xf32>
    %56 = arith.addf %51, %55 : vector<8x256xf32>
    %57 = vector.extract_strided_slice %1 {offsets = [0, 18], sizes = [3, 256], strides = [1, 1]} : vector<3x290xf32> to vector<3x256xf32>
    %c15_i32_26 = arith.constant 15 : i32
    %58 = vector.broadcast %c15_i32_26 : i32 to vector<3x256xi32>
    %59 = arith.cmpi sge, %18, %58 : vector<3x256xi32>
    %cst_27 = arith.constant 0.000000e+00 : f32
    %60 = vector.broadcast %cst_27 : f32 to vector<3x256xf32>
    %61 = arith.select %59, %60, %57 : vector<3x256xi1>, vector<3x256xf32>
    %c5 = arith.constant 5 : index
    %c0_28 = arith.constant 0 : index
    %c0_29 = arith.constant 0 : index
    %62 = vector.load %arg2[%c5, %c0_28, %c0_29] : memref<9x8x3xf32, #tpu.memory_space<vmem>>, vector<1x8x3xf32>
    %63 = vector.shape_cast %62 : vector<1x8x3xf32> to vector<8x3xf32>
    %cst_30 = arith.constant dense<0.000000e+00> : vector<8x256xf32>
    %64 = tpu.matmul %63, %61, %cst_30 {dimension_numbers = #tpu.dot_dimension_numbers<[1], [0], [0], [1], [0, 0, 1, 1], [], []>} : vector<8x3xf32>, vector<3x256xf32>, vector<8x256xf32> -> vector<8x256xf32>
    %65 = arith.addf %56, %64 : vector<8x256xf32>
    %66 = vector.extract_strided_slice %1 {offsets = [0, 32], sizes = [3, 256], strides = [1, 1]} : vector<3x290xf32> to vector<3x256xf32>
    %c1_i32_31 = arith.constant 1 : i32
    %67 = vector.broadcast %c1_i32_31 : i32 to vector<3x256xi32>
    %68 = arith.cmpi slt, %18, %67 : vector<3x256xi32>
    %cst_32 = arith.constant 0.000000e+00 : f32
    %69 = vector.broadcast %cst_32 : f32 to vector<3x256xf32>
    %70 = arith.select %68, %69, %66 : vector<3x256xi1>, vector<3x256xf32>
    %c6 = arith.constant 6 : index
    %c0_33 = arith.constant 0 : index
    %c0_34 = arith.constant 0 : index
    %71 = vector.load %arg2[%c6, %c0_33, %c0_34] : memref<9x8x3xf32, #tpu.memory_space<vmem>>, vector<1x8x3xf32>
    %72 = vector.shape_cast %71 : vector<1x8x3xf32> to vector<8x3xf32>
    %cst_35 = arith.constant dense<0.000000e+00> : vector<8x256xf32>
    %73 = tpu.matmul %72, %70, %cst_35 {dimension_numbers = #tpu.dot_dimension_numbers<[1], [0], [0], [1], [0, 0, 1, 1], [], []>} : vector<8x3xf32>, vector<3x256xf32>, vector<8x256xf32> -> vector<8x256xf32>
    %74 = arith.addf %65, %73 : vector<8x256xf32>
    %75 = vector.extract_strided_slice %1 {offsets = [0, 33], sizes = [3, 256], strides = [1, 1]} : vector<3x290xf32> to vector<3x256xf32>
    %c7 = arith.constant 7 : index
    %c0_36 = arith.constant 0 : index
    %c0_37 = arith.constant 0 : index
    %76 = vector.load %arg2[%c7, %c0_36, %c0_37] : memref<9x8x3xf32, #tpu.memory_space<vmem>>, vector<1x8x3xf32>
    %77 = vector.shape_cast %76 : vector<1x8x3xf32> to vector<8x3xf32>
    %cst_38 = arith.constant dense<0.000000e+00> : vector<8x256xf32>
    %78 = tpu.matmul %77, %75, %cst_38 {dimension_numbers = #tpu.dot_dimension_numbers<[1], [0], [0], [1], [0, 0, 1, 1], [], []>} : vector<8x3xf32>, vector<3x256xf32>, vector<8x256xf32> -> vector<8x256xf32>
    %79 = arith.addf %74, %78 : vector<8x256xf32>
    %80 = vector.extract_strided_slice %1 {offsets = [0, 34], sizes = [3, 256], strides = [1, 1]} : vector<3x290xf32> to vector<3x256xf32>
    %c15_i32_39 = arith.constant 15 : i32
    %81 = vector.broadcast %c15_i32_39 : i32 to vector<3x256xi32>
    %82 = arith.cmpi sge, %18, %81 : vector<3x256xi32>
    %cst_40 = arith.constant 0.000000e+00 : f32
    %83 = vector.broadcast %cst_40 : f32 to vector<3x256xf32>
    %84 = arith.select %82, %83, %80 : vector<3x256xi1>, vector<3x256xf32>
    %c8 = arith.constant 8 : index
    %c0_41 = arith.constant 0 : index
    %c0_42 = arith.constant 0 : index
    %85 = vector.load %arg2[%c8, %c0_41, %c0_42] : memref<9x8x3xf32, #tpu.memory_space<vmem>>, vector<1x8x3xf32>
    %86 = vector.shape_cast %85 : vector<1x8x3xf32> to vector<8x3xf32>
    %cst_43 = arith.constant dense<0.000000e+00> : vector<8x256xf32>
    %87 = tpu.matmul %86, %84, %cst_43 {dimension_numbers = #tpu.dot_dimension_numbers<[1], [0], [0], [1], [0, 0, 1, 1], [], []>} : vector<8x3xf32>, vector<3x256xf32>, vector<8x256xf32> -> vector<8x256xf32>
    %88 = arith.addf %79, %87 : vector<8x256xf32>
    %c0_44 = arith.constant 0 : index
    %c0_45 = arith.constant 0 : index
    %89 = vector.load %arg3[%c0_44, %c0_45] : memref<8x1xf32, #tpu.memory_space<vmem>>, vector<8x1xf32>
    %90 = vector.broadcast %89 : vector<8x1xf32> to vector<8x256xf32>
    %91 = arith.addf %88, %90 : vector<8x256xf32>
    %cst_46 = arith.constant 0.000000e+00 : f32
    %92 = vector.broadcast %cst_46 : f32 to vector<8x256xf32>
    %93 = arith.maximumf %91, %92 : vector<8x256xf32>
    %c0_47 = arith.constant 0 : index
    %c0_48 = arith.constant 0 : index
    %c0_49 = arith.constant 0 : index
    %94 = vector.load %arg4[%c0_47, %c0_48, %c0_49] : memref<1x8x256xf32, #tpu.memory_space<vmem>>, vector<1x8x256xf32>
    %95 = vector.shape_cast %94 : vector<1x8x256xf32> to vector<8x256xf32>
    %96 = vector.shape_cast %93 : vector<8x256xf32> to vector<1x8x256xf32>
    tpu.vector_store %arg4[%c0_47, %c0_48, %c0_49], %96 {strides = array<i32>} : memref<1x8x256xf32, #tpu.memory_space<vmem>>, vector<1x8x256xf32>,
    return
  }
  func.func @transform_0(%arg0: i32) -> (i32, i32, i32) {
    %c0_i32 = arith.constant 0 : i32
    %c0_i32_0 = arith.constant 0 : i32
    %c0_i32_1 = arith.constant 0 : i32
    return %arg0, %c0_i32, %c0_i32_0 : i32, i32, i32
  }
  func.func @transform_1(%arg0: i32) -> (i32, i32, i32) {
    %c0_i32 = arith.constant 0 : i32
    %c0_i32_0 = arith.constant 0 : i32
    %c0_i32_1 = arith.constant 0 : i32
    %c0_i32_2 = arith.constant 0 : i32
    return %c0_i32, %c0_i32_0, %c0_i32_1 : i32, i32, i32
  }
  func.func @transform_2(%arg0: i32) -> (i32, i32) {
    %c0_i32 = arith.constant 0 : i32
    %c0_i32_0 = arith.constant 0 : i32
    %c0_i32_1 = arith.constant 0 : i32
    return %c0_i32, %c0_i32_0 : i32, i32
  }
  func.func @transform_3(%arg0: i32) -> (i32, i32, i32) {
    %c0_i32 = arith.constant 0 : i32
    %c0_i32_0 = arith.constant 0 : i32
    %c0_i32_1 = arith.constant 0 : i32
    return %arg0, %c0_i32, %c0_i32_0 : i32, i32, i32
  }
}

</mosaic_0001>

<llo_original>
// kernel: tpu_custom_call.1
$region0: #{tpu_custom_call.1}
  #allocation0 [shape = 'u32[]', space=smem, size = 0x4, offset = 0x4, fixed_abs, tag = 'smem constant byte address 0x4 - core index']
  #allocation1 [shape = 'u32[144,128]{1,0:T(1,128)}', space=vmem, size = 0x12000, scoped, tag = 'internal scratch']
  %s0 = inlined_call_operand.vmem [shape: f32[2,3,290], index: 0, kind: input, shape index: {}]
  %s1 = inlined_call_operand.vmem [shape: f32[9,8,3], index: 1, kind: input, shape index: {}]
  %s2 = inlined_call_operand.vmem [shape: f32[8,1], index: 2, kind: input, shape index: {}]
  %s3 = inlined_call_operand.hbm [shape: f32[2,8,256], index: 3, kind: output, shape index: {}]
  %s4 = sld [smem:[#allocation0]]
  $region45: #{tpu_custom_call.1} parent=0
    _
  %s6 = ssub.s32 1, %s4
  %s7 = scalar_select 0, %s6, %s4
  $region1: #{tpu_custom_call.1} parent=0
    #allocation2 [shape = 'u8[16384]{0}', space=vmem, size = 0x4000, scoped, tag = 'output window, operand 0']
    #allocation3 [shape = 's32[2]{0}', space=sflag, size = 0x8, scoped, tag = 'scoped memory for tpu_custom_call.1']
    %8 = vsyncpa [#allocation3], 0
    %s9 = scalar_lea.sflag [#allocation3], 1
    %10 = vsyncpa %s9, 0
    loop: start=0, step=1, limit=4
    $region2: #{tpu_custom_call.1} parent=1 // loop_pre_header
      _
    $region3: #{tpu_custom_call.1} parent=1 // loop_header
      %s12 = sphi 0, %s16
      %p13 = scmp.ge.s32.totalorder %s12, 4
      %s22 = sphi 0, %s24
      %s25 = sphi 0, %s22
      %s26 = sphi 0, %s25
      %s42 = sphi 0, %s26
      %s46 = sphi 0, %s46
      %s48 = sphi 0, %s46
      %s49 = sphi 0, %s48
      %s63 = sphi 0, %s49
      %s67 = sphi 0, %s67
      %s69 = sphi 0, %s67
      %s70 = sphi 0, %s69
      %s84 = sphi 0, %s70
      %s90 = sphi 0, %s92
      %s93 = sphi 0, %s90
      %s94 = sphi 0, %s93
      %s110 = sphi 0, %s94
    $region4: #{tpu_custom_call.1} parent=1 // loop_header_branch
      %15 = sbr.rel (%p13) target = $region8
    $region5: #{tpu_custom_call.1} parent=1 // loop_body
      %s17 = ssub.s32 %s12, 1
      %s18 = ssub.s32 %s12, 2
      %s19 = sadd.s32 %s12, 1
      %s20 = ssub.s32 %s12, %s19
      %p21 = scmp.eq.s32.totalorder %s20, 0
      %s23 = sadd.s32 %s22, 1
      %s24 = scalar_select %p21, %s22, %s23
      %p27 = pneg %p21
      %p28 = scmp.eq.s32.totalorder %s12, 1
      %p29 = por %p27, %p28
      %p30 = scmp.ne.s32.totalorder %s22, %s25
      %p31 = scmp.eq.s32.totalorder %s12, 0
      %p32 = por %p30, %p31
      %p33 = scmp.ne.s32.totalorder %s22, %s25
      %p34 = scmp.eq.s32.totalorder %s17, 1
      %p35 = por %p33, %p34
      %p36 = scmp.ne.s32.totalorder %s25, %s26
      %p37 = scmp.eq.s32.totalorder %s17, 0
      %p38 = por %p36, %p37
      %p39 = scmp.ne.s32.totalorder %s25, %s26
      %p40 = scmp.eq.s32.totalorder %s18, 1
      %p41 = por %p39, %p40
      %p43 = scmp.ne.s32.totalorder %s26, %s42
      %p44 = scmp.eq.s32.totalorder %s18, 0
      %p45 = por %p43, %p44
      %s47 = sadd.s32 %s46, 1
      %p50 = scmp.eq.s32.totalorder %s12, 1
      %p51 = scmp.ne.s32.totalorder %s46, %s48
      %p52 = scmp.eq.s32.totalorder %s12, 0
      %p53 = por %p51, %p52
      %p54 = scmp.ne.s32.totalorder %s46, %s48
      %p55 = scmp.eq.s32.totalorder %s17, 1
      %p56 = por %p54, %p55
      %p57 = scmp.ne.s32.totalorder %s48, %s49
      %p58 = scmp.eq.s32.totalorder %s17, 0
      %p59 = por %p57, %p58
      %p60 = scmp.ne.s32.totalorder %s48, %s49
      %p61 = scmp.eq.s32.totalorder %s18, 1
      %p62 = por %p60, %p61
      %p64 = scmp.ne.s32.totalorder %s49, %s63
      %p65 = scmp.eq.s32.totalorder %s18, 0
      %p66 = por %p64, %p65
      %s68 = sadd.s32 %s67, 1
      %p71 = scmp.eq.s32.totalorder %s12, 1
      %p72 = scmp.ne.s32.totalorder %s67, %s69
      %p73 = scmp.eq.s32.totalorder %s12, 0
      %p74 = por %p72, %p73
      %p75 = scmp.ne.s32.totalorder %s67, %s69
      %p76 = scmp.eq.s32.totalorder %s17, 1
      %p77 = por %p75, %p76
      %p78 = scmp.ne.s32.totalorder %s69, %s70
      %p79 = scmp.eq.s32.totalorder %s17, 0
      %p80 = por %p78, %p79
      %p81 = scmp.ne.s32.totalorder %s69, %s70
      %p82 = scmp.eq.s32.totalorder %s18, 1
      %p83 = por %p81, %p82
      %p85 = scmp.ne.s32.totalorder %s70, %s84
      %p86 = scmp.eq.s32.totalorder %s18, 0
      %p87 = por %p85, %p86
      %s88 = ssub.s32 %s12, %s19
      %p89 = scmp.eq.s32.totalorder %s88, 0
      %s91 = sadd.s32 %s90, 1
      %s92 = scalar_select %p89, %s90, %s91
      %p95 = pneg %p89
      %p96 = scmp.eq.s32.totalorder %s12, 1
      %p97 = por %p95, %p96
      %p98 = scmp.ne.s32.totalorder %s90, %s93
      %p99 = scmp.eq.s32.totalorder %s12, 0
      %p100 = por %p98, %p99
      %p101 = scmp.ne.s32.totalorder %s90, %s93
      %p102 = scmp.eq.s32.totalorder %s17, 1
      %p103 = por %p101, %p102
      %p104 = scmp.ne.s32.totalorder %s93, %s94
      %p105 = scmp.eq.s32.totalorder %s17, 0
      %p106 = por %p104, %p105
      %p107 = scmp.ne.s32.totalorder %s93, %s94
      %p108 = scmp.eq.s32.totalorder %s18, 1
      %p109 = por %p107, %p108
      %p111 = scmp.ne.s32.totalorder %s94, %s110
      %p112 = scmp.eq.s32.totalorder %s18, 0
      %p113 = por %p111, %p112
      %p114 = scmp.le.s32.totalorder 1, %s12
      %p115 = scmp.lt.s32.totalorder %s12, 3
      %p116 = pnand %p114, %p115
      %p117 = pneg %p116
      // Predicated region
      $region9: #{tpu_custom_call.1} parent=5 // pred_check
        _
      $region10: #{tpu_custom_call.1} parent=5 // pred_check_branch
        %119 = sbr.rel (%p116) target = $region12
      $region11: #{tpu_custom_call.1} parent=5 // pred_region
        %s120 = ssub.s32 %s12, 1
        // Predicated region
        $region13: #{tpu_custom_call.1} parent=11 // pred_check
          %p121 = pneg %p59
        $region14: #{tpu_custom_call.1} parent=11 // pred_check_branch
          %123 = sbr.rel (%p121) target = $region16
        $region15: #{tpu_custom_call.1} parent=11 // pred_region
          _
        $region16: #{tpu_custom_call.1} parent=11 // pred_fallthru
          _
        // Predicated region
        $region17: #{tpu_custom_call.1} parent=11 // pred_check
          %p124 = pneg %p80
        $region18: #{tpu_custom_call.1} parent=11 // pred_check_branch
          %126 = sbr.rel (%p124) target = $region20
        $region19: #{tpu_custom_call.1} parent=11 // pred_region
          _
        $region20: #{tpu_custom_call.1} parent=11 // pred_fallthru
          _
      $region12: #{tpu_custom_call.1} parent=5 // pred_fallthru
        _
      %p127 = scmp.lt.s32.totalorder %s12, 2
      // Predicated region
      $region21: #{tpu_custom_call.1} parent=5 // pred_check
        %p128 = pneg %p127
      $region22: #{tpu_custom_call.1} parent=5 // pred_check_branch
        %130 = sbr.rel (%p128) target = $region24
      $region23: #{tpu_custom_call.1} parent=5 // pred_region
        // Predicated region
        $region25: #{tpu_custom_call.1} parent=23 // pred_check
          %p131 = pneg %p32
        $region26: #{tpu_custom_call.1} parent=23 // pred_check_branch
          %133 = sbr.rel (%p131) target = $region28
        $region27: #{tpu_custom_call.1} parent=23 // pred_region
          %p134 = scmp.lt.s32.totalorder %s12, 1
          %s135 = scalar_select %p134, %s12, 1
          %s136 = smul.addr %s135, 3
          %s137 = smul.addr %s136, 4
          %s138 = scalar_lea.vmem %s0, %s137
        $region28: #{tpu_custom_call.1} parent=23 // pred_fallthru
          _
      $region24: #{tpu_custom_call.1} parent=5 // pred_fallthru
        _
      %p139 = scmp.le.s32.totalorder 1, %s12
      %p140 = scmp.lt.s32.totalorder %s12, 3
      %p141 = pnand %p139, %p140
      %p142 = pneg %p141
      // Predicated region
      $region29: #{tpu_custom_call.1} parent=5 // pred_check
        _
      $region30: #{tpu_custom_call.1} parent=5 // pred_check_branch
        %144 = sbr.rel (%p141) target = $region32
      $region31: #{tpu_custom_call.1} parent=5 // pred_region
        %s145 = ssub.s32 %s12, 1
        %p146 = scmp.lt.s32.totalorder %s17, 1
        %s147 = scalar_select %p146, %s17, 1
        %s148 = smul.addr %s147, 3
        %s149 = smul.addr %s148, 4
        %s150 = scalar_lea.vmem %s0, %s149
        %p151 = pneg %p38
        %p152 = pneg %p35
        %p153 = pneg %p59
        %p154 = pneg %p56
        %p155 = pneg %p80
        %p156 = pneg %p77
        %p157 = pneg %p106
        %p158 = pneg %p103
        %s159 = sand.u32 %s93, 1
        %s160 = scalar_lea.sflag [#allocation3], %s159
        %s161 = sand.u32 %s93, 1
        %s162 = smul.addr %s161, 16
        %s163 = scalar_lea.vmem [#allocation2], %s162
        %p164 = scmp.lt.s32.totalorder %s17, 1
        %s165 = scalar_select %p164, %s17, 1
        %s166 = smul.addr %s165, 3
        %s167 = smul.addr %s166, 4
        %s168 = scalar_lea.vmem %s0, %s167
        %v169 = vld [vmem:[%s168] sm:$0x77]
        %v170 = vld [vmem:[%s168 + $0x8] sm:$0x7]
        %v171 = vlaneseq
        %v172 = vand.u32 %v171, 127
        %v173 = vadd.s32 %v172, 128
        %vm174 = vcmp.lt.s32.totalorder %v172, 0
        %v175 = vsub.s32 0, %v172
        %v176 = vsel %vm174, %v175, %v172
        %v177 = vshrl.u32 %v176, 4
        %v178 = vand.u32 %v176, 15
        %v179 = vsub.s32 0, %v178
        %v180 = vsel %vm174, %v179, %v178
        %vm181 = vcmp.lt.s32.totalorder %v173, 0
        %v182 = vsub.s32 0, %v173
        %v183 = vsel %vm181, %v182, %v173
        %v184 = vshrl.u32 %v183, 4
        %v185 = vand.u32 %v183, 15
        %v186 = vsub.s32 0, %v185
        %v187 = vsel %vm181, %v186, %v185
        %vm188 = vcmp.ne.s32.totalorder %v180, 0
        %vm189 = vcmp.ne.s32.totalorder %v187, 0
        %vm190 = vcmp.lt.s32.totalorder %v180, 0
        %vm191 = vcmp.lt.s32.totalorder %v187, 0
        %vm192 = vmand %vm190, %vm188
        %vm193 = vmand %vm191, %vm189
        %v194 = vadd.s32 %v180, 16
        %v195 = vadd.s32 %v187, 16
        %v196 = vsel %vm192, %v194, %v180
        %v197 = vsel %vm193, %v195, %v187
        %vm198 = vcmp.lt.s32.totalorder %v196, 1
        %vm199 = vcmp.lt.s32.totalorder %v197, 1
        %v201 = vcombine.high %v169, %v169
        %v203 = vsel %vm198, 0.0, %v169
        %v204 = vsel %vm199, 0.0, %v201
        %v205 = vld [vmem:[%s1] sm:$0xff]
        %s206 = scalar_lea.vmem %s1, 8
        %v207 = vld [vmem:[%s206] sm:$0xff]
        %209 = vrot.lane.b32.xlu0 %v169, 127
        %v210 = vpop.permute.xlu0 %209
        %211 = vrot.lane.b32.xlu0 %v201, 127
        %v212 = vpop.permute.xlu0 %211
        %213 = vrot.lane.b32.xlu0 %v170, 127
        %v214 = vpop.permute.xlu0 %213
        %vm215 = vcmask 1039360
        %v216 = vsel %vm215, %v210, %v212
        %v217 = vsel %vm215, %v212, %v214
        %vm218 = vcmask 23552
        %v220 = vsel %vm218, %v207, 0
        %vm222 = vcmask 1042432
        %v223 = vsel %vm222, %v216, 0
        %v225 = vsel %vm222, %v217, 0
        %227 = vmatprep.subr.mxu0 %v225
        %228 = vmatpush1.msra.mxu0 %v223
        %229 = vmatprep.subr.mxu0 0.0
        %230 = vmatpush1.msra.mxu0 0.0
        %231 = vmatprep.subr.mxu0 0.0
        %232 = vmatpush1.msra.mxu0 0.0
        %233 = vmatprep.subr.mxu0 0.0
        %234 = vmatpush1.msra.mxu0 0.0
        %235 = vmatprep.subr.mxu0 0.0
        %236 = vmatpush1.msra.mxu0 0.0
        %237 = vmatprep.subr.mxu0 0.0
        %238 = vmatpush1.msra.mxu0 0.0
        %239 = vmatprep.subr.mxu0 0.0
        %240 = vmatpush1.msra.mxu0 0.0
        %241 = vmatprep.subr.mxu0 0.0
        %242 = vmatpush1.msra.mxu0 0.0
        %243 = vmatprep.subr.mxu0 0.0
        %244 = vmatpush1.msra.mxu0 0.0
        %245 = vmatprep.subr.mxu0 0.0
        %246 = vmatpush1.msra.mxu0 0.0
        %247 = vmatprep.subr.mxu0 0.0
        %248 = vmatpush1.msra.mxu0 0.0
        %249 = vmatprep.subr.mxu0 0.0
        %250 = vmatpush1.msra.mxu0 0.0
        %251 = vmatprep.subr.mxu0 0.0
        %252 = vmatpush1.msra.mxu0 0.0
        %253 = vmatprep.subr.mxu0 0.0
        %254 = vmatpush1.msra.mxu0 0.0
        %255 = vmatprep.subr.mxu0 0.0
        %256 = vmatpush1.msra.mxu0 0.0
        %257 = vmatprep.subr.mxu0 0.0
        %258 = vmatpush1.msra.mxu0 0.0
        %259 = vmatprep.subr.mxu0 0.0
        %260 = vmatpush1.msra.mxu0 0.0
        %261 = vmatprep.subr.mxu0 0.0
        %262 = vmatpush1.msra.mxu0 0.0
        %263 = vmatprep.subr.mxu0 0.0
        %264 = vmatpush1.msra.mxu0 0.0
        %265 = vmatprep.subr.mxu0 0.0
        %266 = vmatpush1.msra.mxu0 0.0
        %267 = vmatprep.subr.mxu0 0.0
        %268 = vmatpush1.msra.mxu0 0.0
        %269 = vmatprep.subr.mxu0 0.0
        %270 = vmatpush1.msra.mxu0 0.0
        %271 = vmatprep.subr.mxu0 0.0
        %272 = vmatpush1.msra.mxu0 0.0
        %273 = vmatprep.subr.mxu0 0.0
        %274 = vmatpush1.msra.mxu0 0.0
        %275 = vmatprep.subr.mxu0 0.0
        %276 = vmatpush1.msra.mxu0 0.0
        %277 = vmatprep.subr.mxu0 0.0
        %278 = vmatpush1.msra.mxu0 0.0
        %279 = vmatprep.subr.mxu0 0.0
        %280 = vmatpush1.msra.mxu0 0.0
        %281 = vmatprep.subr.mxu0 0.0
        %282 = vmatpush1.msra.mxu0 0.0
        %283 = vmatprep.subr.mxu0 0.0
        %284 = vmatpush1.msra.mxu0 0.0
        %285 = vmatprep.subr.mxu0 0.0
        %286 = vmatpush1.msra.mxu0 0.0
        %287 = vmatprep.subr.mxu0 0.0
        %288 = vmatpush1.msra.mxu0 0.0
        %289 = vmatprep.subr.mxu0 0.0
        %290 = vmatpush1.msra.mxu0 0.0
        %291 = vmatprep.mubr.f32.mxu0 0.0
        %292 = vmatmul.mubr.f32.gmra.mrb[0].mxu0 %v220
        %v293 = vpop.f32.mrb[0].mxu0
        %v294 = vadd.f32 0.0, %v293
        %v295 = vpop.f32.mrb[0].mxu0
        %v296 = vadd.f32 0.0, %v295
        %297 = vdwg.mxu0
        %v299 = vsel %vm218, %v205, 0
        %v302 = vsel %vm222, %v203, 0
        %v305 = vsel %vm222, %v204, 0
        %307 = vmatprep.subr.mxu0 %v305
        %308 = vmatpush1.msra.mxu0 %v302
        %309 = vmatprep.subr.mxu0 0.0
        %310 = vmatpush1.msra.mxu0 0.0
        %311 = vmatprep.subr.mxu0 0.0
        %312 = vmatpush1.msra.mxu0 0.0
        %313 = vmatprep.subr.mxu0 0.0
        %314 = vmatpush1.msra.mxu0 0.0
        %315 = vmatprep.subr.mxu0 0.0
        %316 = vmatpush1.msra.mxu0 0.0
        %317 = vmatprep.subr.mxu0 0.0
        %318 = vmatpush1.msra.mxu0 0.0
        %319 = vmatprep.subr.mxu0 0.0
        %320 = vmatpush1.msra.mxu0 0.0
        %321 = vmatprep.subr.mxu0 0.0
        %322 = vmatpush1.msra.mxu0 0.0
        %323 = vmatprep.subr.mxu0 0.0
        %324 = vmatpush1.msra.mxu0 0.0
        %325 = vmatprep.subr.mxu0 0.0
        %326 = vmatpush1.msra.mxu0 0.0
        %327 = vmatprep.subr.mxu0 0.0
        %328 = vmatpush1.msra.mxu0 0.0
        %329 = vmatprep.subr.mxu0 0.0
        %330 = vmatpush1.msra.mxu0 0.0
        %331 = vmatprep.subr.mxu0 0.0
        %332 = vmatpush1.msra.mxu0 0.0
        %333 = vmatprep.subr.mxu0 0.0
        %334 = vmatpush1.msra.mxu0 0.0
        %335 = vmatprep.subr.mxu0 0.0
        %336 = vmatpush1.msra.mxu0 0.0
        %337 = vmatprep.subr.mxu0 0.0
        %338 = vmatpush1.msra.mxu0 0.0
        %339 = vmatprep.subr.mxu0 0.0
        %340 = vmatpush1.msra.mxu0 0.0
        %341 = vmatprep.subr.mxu0 0.0
        %342 = vmatpush1.msra.mxu0 0.0
        %343 = vmatprep.subr.mxu0 0.0
        %344 = vmatpush1.msra.mxu0 0.0
        %345 = vmatprep.subr.mxu0 0.0
        %346 = vmatpush1.msra.mxu0 0.0
        %347 = vmatprep.subr.mxu0 0.0
        %348 = vmatpush1.msra.mxu0 0.0
        %349 = vmatprep.subr.mxu0 0.0
        %350 = vmatpush1.msra.mxu0 0.0
        %351 = vmatprep.subr.mxu0 0.0
        %352 = vmatpush1.msra.mxu0 0.0
        %353 = vmatprep.subr.mxu0 0.0
        %354 = vmatpush1.msra.mxu0 0.0
        %355 = vmatprep.subr.mxu0 0.0
        %356 = vmatpush1.msra.mxu0 0.0
        %357 = vmatprep.subr.mxu0 0.0
        %358 = vmatpush1.msra.mxu0 0.0
        %359 = vmatprep.subr.mxu0 0.0
        %360 = vmatpush1.msra.mxu0 0.0
        %361 = vmatprep.subr.mxu0 0.0
        %362 = vmatpush1.msra.mxu0 0.0
        %363 = vmatprep.subr.mxu0 0.0
        %364 = vmatpush1.msra.mxu0 0.0
        %365 = vmatprep.subr.mxu0 0.0
        %366 = vmatpush1.msra.mxu0 0.0
        %367 = vmatprep.subr.mxu0 0.0
        %368 = vmatpush1.msra.mxu0 0.0
        %369 = vmatprep.subr.mxu0 0.0
        %370 = vmatpush1.msra.mxu0 0.0
        %371 = vmatprep.mubr.f32.mxu0 0.0
        %372 = vmatmul.mubr.f32.gmra.mrb[0].mxu0 %v299
        %v373 = vpop.f32.mrb[0].mxu0
        %v374 = vadd.f32 %v294, %v373
        %v375 = vpop.f32.mrb[0].mxu0
        %v376 = vadd.f32 %v296, %v375
        %377 = vdwg.mxu0
        %vm378 = vcmp.ge.s32.totalorder %v196, 15
        %vm379 = vcmp.ge.s32.totalorder %v197, 15
        %380 = vrot.lane.b32.xlu0 %v169, 126
        %v381 = vpop.permute.xlu0 %380
        %382 = vrot.lane.b32.xlu0 %v201, 126
        %v383 = vpop.permute.xlu0 %382
        %384 = vrot.lane.b32.xlu0 %v170, 126
        %v385 = vpop.permute.xlu0 %384
        %vm386 = vcmask 1031168
        %v387 = vsel %vm386, %v381, %v383
        %v388 = vsel %vm386, %v383, %v385
        %v391 = vsel %vm378, 0.0, %v387
        %v392 = vsel %vm379, 0.0, %v388
        %s393 = scalar_lea.vmem %s1, 16
        %v394 = vld [vmem:[%s393] sm:$0xff]
        %v396 = vsel %vm218, %v394, 0
        %v399 = vsel %vm222, %v391, 0
        %v402 = vsel %vm222, %v392, 0
        %404 = vmatprep.subr.mxu0 %v402
        %405 = vmatpush1.msra.mxu0 %v399
        %406 = vmatprep.subr.mxu0 0.0
        %407 = vmatpush1.msra.mxu0 0.0
        %408 = vmatprep.subr.mxu0 0.0
        %409 = vmatpush1.msra.mxu0 0.0
        %410 = vmatprep.subr.mxu0 0.0
        %411 = vmatpush1.msra.mxu0 0.0
        %412 = vmatprep.subr.mxu0 0.0
        %413 = vmatpush1.msra.mxu0 0.0
        %414 = vmatprep.subr.mxu0 0.0
        %415 = vmatpush1.msra.mxu0 0.0
        %416 = vmatprep.subr.mxu0 0.0
        %417 = vmatpush1.msra.mxu0 0.0
        %418 = vmatprep.subr.mxu0 0.0
        %419 = vmatpush1.msra.mxu0 0.0
        %420 = vmatprep.subr.mxu0 0.0
        %421 = vmatpush1.msra.mxu0 0.0
        %422 = vmatprep.subr.mxu0 0.0
        %423 = vmatpush1.msra.mxu0 0.0
        %424 = vmatprep.subr.mxu0 0.0
        %425 = vmatpush1.msra.mxu0 0.0
        %426 = vmatprep.subr.mxu0 0.0
        %427 = vmatpush1.msra.mxu0 0.0
        %428 = vmatprep.subr.mxu0 0.0
        %429 = vmatpush1.msra.mxu0 0.0
        %430 = vmatprep.subr.mxu0 0.0
        %431 = vmatpush1.msra.mxu0 0.0
        %432 = vmatprep.subr.mxu0 0.0
        %433 = vmatpush1.msra.mxu0 0.0
        %434 = vmatprep.subr.mxu0 0.0
        %435 = vmatpush1.msra.mxu0 0.0
        %436 = vmatprep.subr.mxu0 0.0
        %437 = vmatpush1.msra.mxu0 0.0
        %438 = vmatprep.subr.mxu0 0.0
        %439 = vmatpush1.msra.mxu0 0.0
        %440 = vmatprep.subr.mxu0 0.0
        %441 = vmatpush1.msra.mxu0 0.0
        %442 = vmatprep.subr.mxu0 0.0
        %443 = vmatpush1.msra.mxu0 0.0
        %444 = vmatprep.subr.mxu0 0.0
        %445 = vmatpush1.msra.mxu0 0.0
        %446 = vmatprep.subr.mxu0 0.0
        %447 = vmatpush1.msra.mxu0 0.0
        %448 = vmatprep.subr.mxu0 0.0
        %449 = vmatpush1.msra.mxu0 0.0
        %450 = vmatprep.subr.mxu0 0.0
        %451 = vmatpush1.msra.mxu0 0.0
        %452 = vmatprep.subr.mxu0 0.0
        %453 = vmatpush1.msra.mxu0 0.0
        %454 = vmatprep.subr.mxu0 0.0
        %455 = vmatpush1.msra.mxu0 0.0
        %456 = vmatprep.subr.mxu0 0.0
        %457 = vmatpush1.msra.mxu0 0.0
        %458 = vmatprep.subr.mxu0 0.0
        %459 = vmatpush1.msra.mxu0 0.0
        %460 = vmatprep.subr.mxu0 0.0
        %461 = vmatpush1.msra.mxu0 0.0
        %462 = vmatprep.subr.mxu0 0.0
        %463 = vmatpush1.msra.mxu0 0.0
        %464 = vmatprep.subr.mxu0 0.0
        %465 = vmatpush1.msra.mxu0 0.0
        %466 = vmatprep.subr.mxu0 0.0
        %467 = vmatpush1.msra.mxu0 0.0
        %468 = vmatprep.mubr.f32.mxu0 0.0
        %469 = vmatmul.mubr.f32.gmra.mrb[0].mxu0 %v396
        %v470 = vpop.f32.mrb[0].mxu0
        %v471 = vadd.f32 0.0, %v470
        %v472 = vpop.f32.mrb[0].mxu0
        %v473 = vadd.f32 0.0, %v472
        %474 = vdwg.mxu0
        %v475 = vadd.f32 %v374, %v471
        %v476 = vadd.f32 %v376, %v473
        %477 = vrot.lane.b32.xlu0 %v169, 112
        %v478 = vpop.permute.xlu0 %477
        %479 = vrot.lane.b32.xlu0 %v201, 112
        %v480 = vpop.permute.xlu0 %479
        %481 = vrot.lane.b32.xlu0 %v170, 112
        %v482 = vpop.permute.xlu0 %481
        %vm483 = vcmask 916480
        %v484 = vsel %vm483, %v478, %v480
        %v485 = vsel %vm483, %v480, %v482
        %v488 = vsel %vm198, 0.0, %v484
        %v489 = vsel %vm199, 0.0, %v485
        %s490 = scalar_lea.vmem %s1, 24
        %v491 = vld [vmem:[%s490] sm:$0xff]
        %v493 = vsel %vm218, %v491, 0
        %v496 = vsel %vm222, %v488, 0
        %v499 = vsel %vm222, %v489, 0
        %501 = vmatprep.subr.mxu0 %v499
        %502 = vmatpush1.msra.mxu0 %v496
        %503 = vmatprep.subr.mxu0 0.0
        %504 = vmatpush1.msra.mxu0 0.0
        %505 = vmatprep.subr.mxu0 0.0
        %506 = vmatpush1.msra.mxu0 0.0
        %507 = vmatprep.subr.mxu0 0.0
        %508 = vmatpush1.msra.mxu0 0.0
        %509 = vmatprep.subr.mxu0 0.0
        %510 = vmatpush1.msra.mxu0 0.0
        %511 = vmatprep.subr.mxu0 0.0
        %512 = vmatpush1.msra.mxu0 0.0
        %513 = vmatprep.subr.mxu0 0.0
        %514 = vmatpush1.msra.mxu0 0.0
        %515 = vmatprep.subr.mxu0 0.0
        %516 = vmatpush1.msra.mxu0 0.0
        %517 = vmatprep.subr.mxu0 0.0
        %518 = vmatpush1.msra.mxu0 0.0
        %519 = vmatprep.subr.mxu0 0.0
        %520 = vmatpush1.msra.mxu0 0.0
        %521 = vmatprep.subr.mxu0 0.0
        %522 = vmatpush1.msra.mxu0 0.0
        %523 = vmatprep.subr.mxu0 0.0
        %524 = vmatpush1.msra.mxu0 0.0
        %525 = vmatprep.subr.mxu0 0.0
        %526 = vmatpush1.msra.mxu0 0.0
        %527 = vmatprep.subr.mxu0 0.0
        %528 = vmatpush1.msra.mxu0 0.0
        %529 = vmatprep.subr.mxu0 0.0
        %530 = vmatpush1.msra.mxu0 0.0
        %531 = vmatprep.subr.mxu0 0.0
        %532 = vmatpush1.msra.mxu0 0.0
        %533 = vmatprep.subr.mxu0 0.0
        %534 = vmatpush1.msra.mxu0 0.0
        %535 = vmatprep.subr.mxu0 0.0
        %536 = vmatpush1.msra.mxu0 0.0
        %537 = vmatprep.subr.mxu0 0.0
        %538 = vmatpush1.msra.mxu0 0.0
        %539 = vmatprep.subr.mxu0 0.0
        %540 = vmatpush1.msra.mxu0 0.0
        %541 = vmatprep.subr.mxu0 0.0
        %542 = vmatpush1.msra.mxu0 0.0
        %543 = vmatprep.subr.mxu0 0.0
        %544 = vmatpush1.msra.mxu0 0.0
        %545 = vmatprep.subr.mxu0 0.0
        %546 = vmatpush1.msra.mxu0 0.0
        %547 = vmatprep.subr.mxu0 0.0
        %548 = vmatpush1.msra.mxu0 0.0
        %549 = vmatprep.subr.mxu0 0.0
        %550 = vmatpush1.msra.mxu0 0.0
        %551 = vmatprep.subr.mxu0 0.0
        %552 = vmatpush1.msra.mxu0 0.0
        %553 = vmatprep.subr.mxu0 0.0
        %554 = vmatpush1.msra.mxu0 0.0
        %555 = vmatprep.subr.mxu0 0.0
        %556 = vmatpush1.msra.mxu0 0.0
        %557 = vmatprep.subr.mxu0 0.0
        %558 = vmatpush1.msra.mxu0 0.0
        %559 = vmatprep.subr.mxu0 0.0
        %560 = vmatpush1.msra.mxu0 0.0
        %561 = vmatprep.subr.mxu0 0.0
        %562 = vmatpush1.msra.mxu0 0.0
        %563 = vmatprep.subr.mxu0 0.0
        %564 = vmatpush1.msra.mxu0 0.0
        %565 = vmatprep.mubr.f32.mxu0 0.0
        %566 = vmatmul.mubr.f32.gmra.mrb[0].mxu0 %v493
        %v567 = vpop.f32.mrb[0].mxu0
        %v568 = vadd.f32 0.0, %v567
        %v569 = vpop.f32.mrb[0].mxu0
        %v570 = vadd.f32 0.0, %v569
        %571 = vdwg.mxu0
        %v572 = vadd.f32 %v475, %v568
        %v573 = vadd.f32 %v476, %v570
        %s574 = scalar_lea.vmem %s1, 32
        %v575 = vld [vmem:[%s574] sm:$0xff]
        %576 = vrot.lane.b32.xlu0 %v169, 111
        %v577 = vpop.permute.xlu0 %576
        %578 = vrot.lane.b32.xlu0 %v201, 111
        %v579 = vpop.permute.xlu0 %578
        %580 = vrot.lane.b32.xlu0 %v170, 111
        %v581 = vpop.permute.xlu0 %580
        %vm582 = vcmask 908288
        %v583 = vsel %vm582, %v577, %v579
        %v584 = vsel %vm582, %v579, %v581
        %v586 = vsel %vm218, %v575, 0
        %v588 = vsel %vm222, %v583, 0
        %v590 = vsel %vm222, %v584, 0
        %592 = vmatprep.subr.mxu0 %v590
        %593 = vmatpush1.msra.mxu0 %v588
        %594 = vmatprep.subr.mxu0 0.0
        %595 = vmatpush1.msra.mxu0 0.0
        %596 = vmatprep.subr.mxu0 0.0
        %597 = vmatpush1.msra.mxu0 0.0
        %598 = vmatprep.subr.mxu0 0.0
        %599 = vmatpush1.msra.mxu0 0.0
        %600 = vmatprep.subr.mxu0 0.0
        %601 = vmatpush1.msra.mxu0 0.0
        %602 = vmatprep.subr.mxu0 0.0
        %603 = vmatpush1.msra.mxu0 0.0
        %604 = vmatprep.subr.mxu0 0.0
        %605 = vmatpush1.msra.mxu0 0.0
        %606 = vmatprep.subr.mxu0 0.0
        %607 = vmatpush1.msra.mxu0 0.0
        %608 = vmatprep.subr.mxu0 0.0
        %609 = vmatpush1.msra.mxu0 0.0
        %610 = vmatprep.subr.mxu0 0.0
        %611 = vmatpush1.msra.mxu0 0.0
        %612 = vmatprep.subr.mxu0 0.0
        %613 = vmatpush1.msra.mxu0 0.0
        %614 = vmatprep.subr.mxu0 0.0
        %615 = vmatpush1.msra.mxu0 0.0
        %616 = vmatprep.subr.mxu0 0.0
        %617 = vmatpush1.msra.mxu0 0.0
        %618 = vmatprep.subr.mxu0 0.0
        %619 = vmatpush1.msra.mxu0 0.0
        %620 = vmatprep.subr.mxu0 0.0
        %621 = vmatpush1.msra.mxu0 0.0
        %622 = vmatprep.subr.mxu0 0.0
        %623 = vmatpush1.msra.mxu0 0.0
        %624 = vmatprep.subr.mxu0 0.0
        %625 = vmatpush1.msra.mxu0 0.0
        %626 = vmatprep.subr.mxu0 0.0
        %627 = vmatpush1.msra.mxu0 0.0
        %628 = vmatprep.subr.mxu0 0.0
        %629 = vmatpush1.msra.mxu0 0.0
        %630 = vmatprep.subr.mxu0 0.0
        %631 = vmatpush1.msra.mxu0 0.0
        %632 = vmatprep.subr.mxu0 0.0
        %633 = vmatpush1.msra.mxu0 0.0
        %634 = vmatprep.subr.mxu0 0.0
        %635 = vmatpush1.msra.mxu0 0.0
        %636 = vmatprep.subr.mxu0 0.0
        %637 = vmatpush1.msra.mxu0 0.0
        %638 = vmatprep.subr.mxu0 0.0
        %639 = vmatpush1.msra.mxu0 0.0
        %640 = vmatprep.subr.mxu0 0.0
        %641 = vmatpush1.msra.mxu0 0.0
        %642 = vmatprep.subr.mxu0 0.0
        %643 = vmatpush1.msra.mxu0 0.0
        %644 = vmatprep.subr.mxu0 0.0
        %645 = vmatpush1.msra.mxu0 0.0
        %646 = vmatprep.subr.mxu0 0.0
        %647 = vmatpush1.msra.mxu0 0.0
        %648 = vmatprep.subr.mxu0 0.0
        %649 = vmatpush1.msra.mxu0 0.0
        %650 = vmatprep.subr.mxu0 0.0
        %651 = vmatpush1.msra.mxu0 0.0
        %652 = vmatprep.subr.mxu0 0.0
        %653 = vmatpush1.msra.mxu0 0.0
        %654 = vmatprep.subr.mxu0 0.0
        %655 = vmatpush1.msra.mxu0 0.0
        %656 = vmatprep.mubr.f32.mxu0 0.0
        %657 = vmatmul.mubr.f32.gmra.mrb[0].mxu0 %v586
        %v658 = vpop.f32.mrb[0].mxu0
        %v659 = vadd.f32 0.0, %v658
        %v660 = vpop.f32.mrb[0].mxu0
        %v661 = vadd.f32 0.0, %v660
        %662 = vdwg.mxu0
        %v663 = vadd.f32 %v572, %v659
        %v664 = vadd.f32 %v573, %v661
        %665 = vrot.lane.b32.xlu0 %v169, 110
        %v666 = vpop.permute.xlu0 %665
        %667 = vrot.lane.b32.xlu0 %v201, 110
        %v668 = vpop.permute.xlu0 %667
        %669 = vrot.lane.b32.xlu0 %v170, 110
        %v670 = vpop.permute.xlu0 %669
        %vm671 = vcmask 900096
        %v672 = vsel %vm671, %v666, %v668
        %v673 = vsel %vm671, %v668, %v670
        %v676 = vsel %vm378, 0.0, %v672
        %v677 = vsel %vm379, 0.0, %v673
        %s678 = scalar_lea.vmem %s1, 40
        %v679 = vld [vmem:[%s678] sm:$0xff]
        %v681 = vsel %vm218, %v679, 0
        %v684 = vsel %vm222, %v676, 0
        %v687 = vsel %vm222, %v677, 0
        %689 = vmatprep.subr.mxu0 %v687
        %690 = vmatpush1.msra.mxu0 %v684
        %691 = vmatprep.subr.mxu0 0.0
        %692 = vmatpush1.msra.mxu0 0.0
        %693 = vmatprep.subr.mxu0 0.0
        %694 = vmatpush1.msra.mxu0 0.0
        %695 = vmatprep.subr.mxu0 0.0
        %696 = vmatpush1.msra.mxu0 0.0
        %697 = vmatprep.subr.mxu0 0.0
        %698 = vmatpush1.msra.mxu0 0.0
        %699 = vmatprep.subr.mxu0 0.0
        %700 = vmatpush1.msra.mxu0 0.0
        %701 = vmatprep.subr.mxu0 0.0
        %702 = vmatpush1.msra.mxu0 0.0
        %703 = vmatprep.subr.mxu0 0.0
        %704 = vmatpush1.msra.mxu0 0.0
        %705 = vmatprep.subr.mxu0 0.0
        %706 = vmatpush1.msra.mxu0 0.0
        %707 = vmatprep.subr.mxu0 0.0
        %708 = vmatpush1.msra.mxu0 0.0
        %709 = vmatprep.subr.mxu0 0.0
        %710 = vmatpush1.msra.mxu0 0.0
        %711 = vmatprep.subr.mxu0 0.0
        %712 = vmatpush1.msra.mxu0 0.0
        %713 = vmatprep.subr.mxu0 0.0
        %714 = vmatpush1.msra.mxu0 0.0
        %715 = vmatprep.subr.mxu0 0.0
        %716 = vmatpush1.msra.mxu0 0.0
        %717 = vmatprep.subr.mxu0 0.0
        %718 = vmatpush1.msra.mxu0 0.0
        %719 = vmatprep.subr.mxu0 0.0
        %720 = vmatpush1.msra.mxu0 0.0
        %721 = vmatprep.subr.mxu0 0.0
        %722 = vmatpush1.msra.mxu0 0.0
        %723 = vmatprep.subr.mxu0 0.0
        %724 = vmatpush1.msra.mxu0 0.0
        %725 = vmatprep.subr.mxu0 0.0
        %726 = vmatpush1.msra.mxu0 0.0
        %727 = vmatprep.subr.mxu0 0.0
        %728 = vmatpush1.msra.mxu0 0.0
        %729 = vmatprep.subr.mxu0 0.0
        %730 = vmatpush1.msra.mxu0 0.0
        %731 = vmatprep.subr.mxu0 0.0
        %732 = vmatpush1.msra.mxu0 0.0
        %733 = vmatprep.subr.mxu0 0.0
        %734 = vmatpush1.msra.mxu0 0.0
        %735 = vmatprep.subr.mxu0 0.0
        %736 = vmatpush1.msra.mxu0 0.0
        %737 = vmatprep.subr.mxu0 0.0
        %738 = vmatpush1.msra.mxu0 0.0
        %739 = vmatprep.subr.mxu0 0.0
        %740 = vmatpush1.msra.mxu0 0.0
        %741 = vmatprep.subr.mxu0 0.0
        %742 = vmatpush1.msra.mxu0 0.0
        %743 = vmatprep.subr.mxu0 0.0
        %744 = vmatpush1.msra.mxu0 0.0
        %745 = vmatprep.subr.mxu0 0.0
        %746 = vmatpush1.msra.mxu0 0.0
        %747 = vmatprep.subr.mxu0 0.0
        %748 = vmatpush1.msra.mxu0 0.0
        %749 = vmatprep.subr.mxu0 0.0
        %750 = vmatpush1.msra.mxu0 0.0
        %751 = vmatprep.subr.mxu0 0.0
        %752 = vmatpush1.msra.mxu0 0.0
        %753 = vmatprep.mubr.f32.mxu0 0.0
        %754 = vmatmul.mubr.f32.gmra.mrb[0].mxu0 %v681
        %v755 = vpop.f32.mrb[0].mxu0
        %v756 = vadd.f32 0.0, %v755
        %v757 = vpop.f32.mrb[0].mxu0
        %v758 = vadd.f32 0.0, %v757
        %759 = vdwg.mxu0
        %v760 = vadd.f32 %v663, %v756
        %v761 = vadd.f32 %v664, %v758
        %762 = vrot.lane.b32.xlu0 %v169, 96
        %v763 = vpop.permute.xlu0 %762
        %764 = vrot.lane.b32.xlu0 %v201, 96
        %v765 = vpop.permute.xlu0 %764
        %766 = vrot.lane.b32.xlu0 %v170, 96
        %v767 = vpop.permute.xlu0 %766
        %vm768 = vcmask 785408
        %v769 = vsel %vm768, %v763, %v765
        %v770 = vsel %vm768, %v765, %v767
        %v773 = vsel %vm198, 0.0, %v769
        %v774 = vsel %vm199, 0.0, %v770
        %s775 = scalar_lea.vmem %s1, 48
        %v776 = vld [vmem:[%s775] sm:$0xff]
        %v778 = vsel %vm218, %v776, 0
        %v781 = vsel %vm222, %v773, 0
        %v784 = vsel %vm222, %v774, 0
        %786 = vmatprep.subr.mxu0 %v784
        %787 = vmatpush1.msra.mxu0 %v781
        %788 = vmatprep.subr.mxu0 0.0
        %789 = vmatpush1.msra.mxu0 0.0
        %790 = vmatprep.subr.mxu0 0.0
        %791 = vmatpush1.msra.mxu0 0.0
        %792 = vmatprep.subr.mxu0 0.0
        %793 = vmatpush1.msra.mxu0 0.0
        %794 = vmatprep.subr.mxu0 0.0
        %795 = vmatpush1.msra.mxu0 0.0
        %796 = vmatprep.subr.mxu0 0.0
        %797 = vmatpush1.msra.mxu0 0.0
        %798 = vmatprep.subr.mxu0 0.0
        %799 = vmatpush1.msra.mxu0 0.0
        %800 = vmatprep.subr.mxu0 0.0
        %801 = vmatpush1.msra.mxu0 0.0
        %802 = vmatprep.subr.mxu0 0.0
        %803 = vmatpush1.msra.mxu0 0.0
        %804 = vmatprep.subr.mxu0 0.0
        %805 = vmatpush1.msra.mxu0 0.0
        %806 = vmatprep.subr.mxu0 0.0
        %807 = vmatpush1.msra.mxu0 0.0
        %808 = vmatprep.subr.mxu0 0.0
        %809 = vmatpush1.msra.mxu0 0.0
        %810 = vmatprep.subr.mxu0 0.0
        %811 = vmatpush1.msra.mxu0 0.0
        %812 = vmatprep.subr.mxu0 0.0
        %813 = vmatpush1.msra.mxu0 0.0
        %814 = vmatprep.subr.mxu0 0.0
        %815 = vmatpush1.msra.mxu0 0.0
        %816 = vmatprep.subr.mxu0 0.0
        %817 = vmatpush1.msra.mxu0 0.0
        %818 = vmatprep.subr.mxu0 0.0
        %819 = vmatpush1.msra.mxu0 0.0
        %820 = vmatprep.subr.mxu0 0.0
        %821 = vmatpush1.msra.mxu0 0.0
        %822 = vmatprep.subr.mxu0 0.0
        %823 = vmatpush1.msra.mxu0 0.0
        %824 = vmatprep.subr.mxu0 0.0
        %825 = vmatpush1.msra.mxu0 0.0
        %826 = vmatprep.subr.mxu0 0.0
        %827 = vmatpush1.msra.mxu0 0.0
        %828 = vmatprep.subr.mxu0 0.0
        %829 = vmatpush1.msra.mxu0 0.0
        %830 = vmatprep.subr.mxu0 0.0
        %831 = vmatpush1.msra.mxu0 0.0
        %832 = vmatprep.subr.mxu0 0.0
        %833 = vmatpush1.msra.mxu0 0.0
        %834 = vmatprep.subr.mxu0 0.0
        %835 = vmatpush1.msra.mxu0 0.0
        %836 = vmatprep.subr.mxu0 0.0
        %837 = vmatpush1.msra.mxu0 0.0
        %838 = vmatprep.subr.mxu0 0.0
        %839 = vmatpush1.msra.mxu0 0.0
        %840 = vmatprep.subr.mxu0 0.0
        %841 = vmatpush1.msra.mxu0 0.0
        %842 = vmatprep.subr.mxu0 0.0
        %843 = vmatpush1.msra.mxu0 0.0
        %844 = vmatprep.subr.mxu0 0.0
        %845 = vmatpush1.msra.mxu0 0.0
        %846 = vmatprep.subr.mxu0 0.0
        %847 = vmatpush1.msra.mxu0 0.0
        %848 = vmatprep.subr.mxu0 0.0
        %849 = vmatpush1.msra.mxu0 0.0
        %850 = vmatprep.mubr.f32.mxu0 0.0
        %851 = vmatmul.mubr.f32.gmra.mrb[0].mxu0 %v778
        %v852 = vpop.f32.mrb[0].mxu0
        %v853 = vadd.f32 0.0, %v852
        %v854 = vpop.f32.mrb[0].mxu0
        %v855 = vadd.f32 0.0, %v854
        %856 = vdwg.mxu0
        %v857 = vadd.f32 %v760, %v853
        %v858 = vadd.f32 %v761, %v855
        %s859 = scalar_lea.vmem %s1, 56
        %v860 = vld [vmem:[%s859] sm:$0xff]
        %861 = vrot.lane.b32.xlu0 %v169, 95
        %v862 = vpop.permute.xlu0 %861
        %863 = vrot.lane.b32.xlu0 %v201, 95
        %v864 = vpop.permute.xlu0 %863
        %865 = vrot.lane.b32.xlu0 %v170, 95
        %v866 = vpop.permute.xlu0 %865
        %vm867 = vcmask 777216
        %v868 = vsel %vm867, %v862, %v864
        %v869 = vsel %vm867, %v864, %v866
        %v871 = vsel %vm218, %v860, 0
        %v873 = vsel %vm222, %v868, 0
        %v875 = vsel %vm222, %v869, 0
        %877 = vmatprep.subr.mxu0 %v875
        %878 = vmatpush1.msra.mxu0 %v873
        %879 = vmatprep.subr.mxu0 0.0
        %880 = vmatpush1.msra.mxu0 0.0
        %881 = vmatprep.subr.mxu0 0.0
        %882 = vmatpush1.msra.mxu0 0.0
        %883 = vmatprep.subr.mxu0 0.0
        %884 = vmatpush1.msra.mxu0 0.0
        %885 = vmatprep.subr.mxu0 0.0
        %886 = vmatpush1.msra.mxu0 0.0
        %887 = vmatprep.subr.mxu0 0.0
        %888 = vmatpush1.msra.mxu0 0.0
        %889 = vmatprep.subr.mxu0 0.0
        %890 = vmatpush1.msra.mxu0 0.0
        %891 = vmatprep.subr.mxu0 0.0
        %892 = vmatpush1.msra.mxu0 0.0
        %893 = vmatprep.subr.mxu0 0.0
        %894 = vmatpush1.msra.mxu0 0.0
        %895 = vmatprep.subr.mxu0 0.0
        %896 = vmatpush1.msra.mxu0 0.0
        %897 = vmatprep.subr.mxu0 0.0
        %898 = vmatpush1.msra.mxu0 0.0
        %899 = vmatprep.subr.mxu0 0.0
        %900 = vmatpush1.msra.mxu0 0.0
        %901 = vmatprep.subr.mxu0 0.0
        %902 = vmatpush1.msra.mxu0 0.0
        %903 = vmatprep.subr.mxu0 0.0
        %904 = vmatpush1.msra.mxu0 0.0
        %905 = vmatprep.subr.mxu0 0.0
        %906 = vmatpush1.msra.mxu0 0.0
        %907 = vmatprep.subr.mxu0 0.0
        %908 = vmatpush1.msra.mxu0 0.0
        %909 = vmatprep.subr.mxu0 0.0
        %910 = vmatpush1.msra.mxu0 0.0
        %911 = vmatprep.subr.mxu0 0.0
        %912 = vmatpush1.msra.mxu0 0.0
        %913 = vmatprep.subr.mxu0 0.0
        %914 = vmatpush1.msra.mxu0 0.0
        %915 = vmatprep.subr.mxu0 0.0
        %916 = vmatpush1.msra.mxu0 0.0
        %917 = vmatprep.subr.mxu0 0.0
        %918 = vmatpush1.msra.mxu0 0.0
        %919 = vmatprep.subr.mxu0 0.0
        %920 = vmatpush1.msra.mxu0 0.0
        %921 = vmatprep.subr.mxu0 0.0
        %922 = vmatpush1.msra.mxu0 0.0
        %923 = vmatprep.subr.mxu0 0.0
        %924 = vmatpush1.msra.mxu0 0.0
        %925 = vmatprep.subr.mxu0 0.0
        %926 = vmatpush1.msra.mxu0 0.0
        %927 = vmatprep.subr.mxu0 0.0
        %928 = vmatpush1.msra.mxu0 0.0
        %929 = vmatprep.subr.mxu0 0.0
        %930 = vmatpush1.msra.mxu0 0.0
        %931 = vmatprep.subr.mxu0 0.0
        %932 = vmatpush1.msra.mxu0 0.0
        %933 = vmatprep.subr.mxu0 0.0
        %934 = vmatpush1.msra.mxu0 0.0
        %935 = vmatprep.subr.mxu0 0.0
        %936 = vmatpush1.msra.mxu0 0.0
        %937 = vmatprep.subr.mxu0 0.0
        %938 = vmatpush1.msra.mxu0 0.0
        %939 = vmatprep.subr.mxu0 0.0
        %940 = vmatpush1.msra.mxu0 0.0
        %941 = vmatprep.mubr.f32.mxu0 0.0
        %942 = vmatmul.mubr.f32.gmra.mrb[0].mxu0 %v871
        %v943 = vpop.f32.mrb[0].mxu0
        %v944 = vadd.f32 0.0, %v943
        %v945 = vpop.f32.mrb[0].mxu0
        %v946 = vadd.f32 0.0, %v945
        %947 = vdwg.mxu0
        %v948 = vadd.f32 %v857, %v944
        %v949 = vadd.f32 %v858, %v946
        %950 = vrot.lane.b32.xlu0 %v169, 94
        %v951 = vpop.permute.xlu0 %950
        %952 = vrot.lane.b32.xlu0 %v201, 94
        %v953 = vpop.permute.xlu0 %952
        %954 = vrot.lane.b32.xlu0 %v170, 94
        %v955 = vpop.permute.xlu0 %954
        %vm956 = vcmask 769024
        %v957 = vsel %vm956, %v951, %v953
        %v958 = vsel %vm956, %v953, %v955
        %v961 = vsel %vm378, 0.0, %v957
        %v962 = vsel %vm379, 0.0, %v958
        %s963 = scalar_lea.vmem %s1, 64
        %v964 = vld [vmem:[%s963] sm:$0xff]
        %v966 = vsel %vm218, %v964, 0
        %v969 = vsel %vm222, %v961, 0
        %v972 = vsel %vm222, %v962, 0
        %974 = vmatprep.subr.mxu0 %v972
        %975 = vmatpush1.msra.mxu0 %v969
        %976 = vmatprep.subr.mxu0 0.0
        %977 = vmatpush1.msra.mxu0 0.0
        %978 = vmatprep.subr.mxu0 0.0
        %979 = vmatpush1.msra.mxu0 0.0
        %980 = vmatprep.subr.mxu0 0.0
        %981 = vmatpush1.msra.mxu0 0.0
        %982 = vmatprep.subr.mxu0 0.0
        %983 = vmatpush1.msra.mxu0 0.0
        %984 = vmatprep.subr.mxu0 0.0
        %985 = vmatpush1.msra.mxu0 0.0
        %986 = vmatprep.subr.mxu0 0.0
        %987 = vmatpush1.msra.mxu0 0.0
        %988 = vmatprep.subr.mxu0 0.0
        %989 = vmatpush1.msra.mxu0 0.0
        %990 = vmatprep.subr.mxu0 0.0
        %991 = vmatpush1.msra.mxu0 0.0
        %992 = vmatprep.subr.mxu0 0.0
        %993 = vmatpush1.msra.mxu0 0.0
        %994 = vmatprep.subr.mxu0 0.0
        %995 = vmatpush1.msra.mxu0 0.0
        %996 = vmatprep.subr.mxu0 0.0
        %997 = vmatpush1.msra.mxu0 0.0
        %998 = vmatprep.subr.mxu0 0.0
        %999 = vmatpush1.msra.mxu0 0.0
        %1000 = vmatprep.subr.mxu0 0.0
        %1001 = vmatpush1.msra.mxu0 0.0
        %1002 = vmatprep.subr.mxu0 0.0
        %1003 = vmatpush1.msra.mxu0 0.0
        %1004 = vmatprep.subr.mxu0 0.0
        %1005 = vmatpush1.msra.mxu0 0.0
        %1006 = vmatprep.subr.mxu0 0.0
        %1007 = vmatpush1.msra.mxu0 0.0
        %1008 = vmatprep.subr.mxu0 0.0
        %1009 = vmatpush1.msra.mxu0 0.0
        %1010 = vmatprep.subr.mxu0 0.0
        %1011 = vmatpush1.msra.mxu0 0.0
        %1012 = vmatprep.subr.mxu0 0.0
        %1013 = vmatpush1.msra.mxu0 0.0
        %1014 = vmatprep.subr.mxu0 0.0
        %1015 = vmatpush1.msra.mxu0 0.0
        %1016 = vmatprep.subr.mxu0 0.0
        %1017 = vmatpush1.msra.mxu0 0.0
        %1018 = vmatprep.subr.mxu0 0.0
        %1019 = vmatpush1.msra.mxu0 0.0
        %1020 = vmatprep.subr.mxu0 0.0
        %1021 = vmatpush1.msra.mxu0 0.0
        %1022 = vmatprep.subr.mxu0 0.0
        %1023 = vmatpush1.msra.mxu0 0.0
        %1024 = vmatprep.subr.mxu0 0.0
        %1025 = vmatpush1.msra.mxu0 0.0
        %1026 = vmatprep.subr.mxu0 0.0
        %1027 = vmatpush1.msra.mxu0 0.0
        %1028 = vmatprep.subr.mxu0 0.0
        %1029 = vmatpush1.msra.mxu0 0.0
        %1030 = vmatprep.subr.mxu0 0.0
        %1031 = vmatpush1.msra.mxu0 0.0
        %1032 = vmatprep.subr.mxu0 0.0
        %1033 = vmatpush1.msra.mxu0 0.0
        %1034 = vmatprep.subr.mxu0 0.0
        %1035 = vmatpush1.msra.mxu0 0.0
        %1036 = vmatprep.subr.mxu0 0.0
        %1037 = vmatpush1.msra.mxu0 0.0
        %1038 = vmatprep.mubr.f32.mxu0 0.0
        %1039 = vmatmul.mubr.f32.gmra.mrb[0].mxu0 %v966
        %v1040 = vpop.f32.mrb[0].mxu0
        %v1041 = vadd.f32 0.0, %v1040
        %v1042 = vpop.f32.mrb[0].mxu0
        %v1043 = vadd.f32 0.0, %v1042
        %1044 = vdwg.mxu0
        %v1045 = vadd.f32 %v948, %v1041
        %v1046 = vadd.f32 %v949, %v1043
        %v1047 = vld [vmem:[%s2] sm:$0xff]
        %1049 = vset.pattern.permute.xlu0 0
        %1050 = vperm.xlu0 %1049, %v1047
        %v1051 = vpop.permute.xlu0 %1050
        %v1053 = vadd.f32 %v1045, %v1051
        %v1054 = vadd.f32 %v1046, %v1051
        %v1055 = vmax.f32 %v1053, 0.0
        %v1056 = vmax.f32 %v1054, 0.0
        %1057 = vst [vmem:[%s163] sm:$0xff] %v1055
        %1058 = vst [vmem:[%s163 + $0x8] sm:$0xff] %v1056
        %s1059 = sand.u32 %s93, 1
        %s1060 = scalar_lea.sflag [#allocation3], %s1059
        %s1061 = sand.u32 %s93, 1
        %s1062 = smul.addr %s1061, 16
        %s1063 = scalar_lea.vmem [#allocation2], %s1062
        // Predicated region
        $region33: #{tpu_custom_call.1} parent=31 // pred_check
          %p1064 = pneg %p103
        $region34: #{tpu_custom_call.1} parent=31 // pred_check_branch
          %1066 = sbr.rel (%p1064) target = $region36
        $region35: #{tpu_custom_call.1} parent=31 // pred_region
          %s1068 = ssub.s32 256, 256
          %1069 = vsyncadd %s1060, %s1068
          %s1070 = smul.addr %s17, 2
          %s1071 = smul.addr %s1070, 128
          %s1072 = scalar_lea.hbm %s3, %s1071
          %s1074 = sshll.u32 %s1063, 4
          %s1075 = int_to_ptr.vmem [resolvable:$true] %s1074
          %1077 = dma.vmem_to_hbm [thread:$0]  %s1075, 256, %s1072, %s1060
        $region36: #{tpu_custom_call.1} parent=31 // pred_fallthru
          _
      $region32: #{tpu_custom_call.1} parent=5 // pred_fallthru
        _
      %p1078 = scmp.le.s32.totalorder 2, %s12
      // Predicated region
      $region37: #{tpu_custom_call.1} parent=5 // pred_check
        %p1079 = pneg %p1078
      $region38: #{tpu_custom_call.1} parent=5 // pred_check_branch
        %1081 = sbr.rel (%p1079) target = $region40
      $region39: #{tpu_custom_call.1} parent=5 // pred_region
        %s1082 = ssub.s32 %s12, 2
        // Predicated region
        $region41: #{tpu_custom_call.1} parent=39 // pred_check
          %p1083 = pneg %p109
        $region42: #{tpu_custom_call.1} parent=39 // pred_check_branch
          %1085 = sbr.rel (%p1083) target = $region44
        $region43: #{tpu_custom_call.1} parent=39 // pred_region
          %s1086 = sand.u32 %s94, 1
          %s1087 = scalar_lea.sflag [#allocation3], %s1086
          %s1088 = sand.u32 %s94, 1
          %s1089 = smul.addr %s1088, 16
          %s1090 = scalar_lea.vmem [#allocation2], %s1089
          %1091 = dma.done %s1087, 256
        $region44: #{tpu_custom_call.1} parent=39 // pred_fallthru
          _
      $region40: #{tpu_custom_call.1} parent=5 // pred_fallthru
        _
    $region6: #{tpu_custom_call.1} parent=1 // loop_footer
      %s16 = sadd.s32 1, %s12
    $region7: #{tpu_custom_call.1} parent=1 // loop_footer_branch
      %11 = sbr.rel target = $region3
    $region8: #{tpu_custom_call.1} parent=1 // loop_exit
      _
    %1092 = vsyncpa [#allocation3], 1
    %s1093 = scalar_lea.sflag [#allocation3], 1
    %1094 = vsyncpa %s1093, 1

</llo_original>
